<compile_context>
chip_gen: v7x
topology: tpu7x:2x2x1
jax: 0.10.0
libtpu: 0.0.40
codegen_flags: <defaults>
</compile_context>

<pallas_src>
import numpy as np
import jax
import jax.numpy as jnp
from jax.experimental import pallas as pl
from jax.experimental.pallas import tpu as pltpu

SAMPLE_RATIO = 0.1
FILTER_DEPTH = 1e-8
SIGMA = 0.15
ALPHA = 1.0
MIN_SAMPLES = 2000
MASK_VALUE = 1e-8


# --------------------------------------------------------------------------- #
# Pallas kernel 1: fused Sobel edge magnitude + |cos theta|, |sin theta|
# --------------------------------------------------------------------------- #
def _sobel_kernel(img_ref, edge_ref, acos_ref, asin_ref):
    img = img_ref[0]                                   # (H, W), lane-dense
    H, W = img.shape
    # 3x3 neighborhood via XLU rotations; the circular wrap only touches the masked border.
    dn = pltpu.roll(img, 1, axis=0)                    # row i <- row i-1
    up = pltpu.roll(img, H - 1, axis=0)                # row i <- row i+1
    rowsum = dn + 2.0 * img + up                       # vertical smoothing
    rowdiff = dn - up                                  # vertical difference
    # a = [[-1,0,1],[-2,0,2],[-1,0,1]], b = [[1,2,1],[0,0,0],[-1,-2,-1]]  (cross-correlation)
    gx = pltpu.roll(rowsum, W - 1, axis=1) - pltpu.roll(rowsum, 1, axis=1)
    gy = pltpu.roll(rowdiff, 1, axis=1) + 2.0 * rowdiff + pltpu.roll(rowdiff, W - 1, axis=1)

    rows = jax.lax.broadcasted_iota(jnp.int32, (H, W), 0)
    cols = jax.lax.broadcasted_iota(jnp.int32, (H, W), 1)
    interior = (rows >= 1) & (rows < H - 1) & (cols >= 1) & (cols < W - 1)

    edge = jnp.where(interior, jnp.sqrt(gx * gx + gy * gy), 0.0)
    pos = edge > 0.0
    inv = pl.reciprocal(jnp.where(pos, edge, 1.0), approx=True)
    # atan2(0,0) == 0 in the reference -> |cos| = 1, |sin| = 0 on the border / flat regions.
    edge_ref[0] = edge
    acos_ref[0] = jnp.where(pos, jnp.abs(gx) * inv, 1.0)
    asin_ref[0] = jnp.where(pos, jnp.abs(gy) * inv, 0.0)


def sobel_edges(images):
    """images: (N, H, W) float32 -> (edge, |cos theta|, |sin theta|), each (N, H, W)."""
    N, H, W = images.shape
    sds = jax.ShapeDtypeStruct((N, H, W), images.dtype)
    spec = pl.BlockSpec((1, H, W), lambda i: (i, 0, 0))
    # 1 input + 3 outputs, double-buffered, + headroom; capped at 64 MiB (v7x physical VMEM).
    # TODO(synk): switch to row-halo tiles (grid (N, H//TH)) on v7x for large images.
    vmem_limit = int(min(max(32 * 1024 * 1024, 10 * H * W * 4), 64 * 1024 * 1024))
    edge, acos, asin = pl.pallas_call(
        _sobel_kernel,
        out_shape=(sds, sds, sds),
        grid=(N,),
        in_specs=[spec],
        out_specs=(spec, spec, spec),
        compiler_params=pltpu.CompilerParams(
            dimension_semantics=("parallel",), vmem_limit_bytes=vmem_limit),
    )(images)
    return edge, acos, asin


# --------------------------------------------------------------------------- #
# Pallas kernel 2: batched ranking loss, tiled accumulation (reduce deferred)
# --------------------------------------------------------------------------- #
def _ranking_loss_kernel(data_ref, out_ref, acc_ref):
    step = pl.program_id(1)

    @pl.when(step == 0)
    def _():
        acc_ref[...] = jnp.zeros_like(acc_ref)

    iA = data_ref[0]                   # (tr, 128)
    iB = data_ref[1]
    labels = data_ref[2]               # -1 / 0 / +1; 0 on padding and "equal" pairs
    w = data_ref[3]                    # consistency * 1/(c*M_sample); 0 on padding

    diff = iA - iB
    # numerically stable softplus((iB - iA) * labels); reference does log(1+exp(.)) in f64
    x = -diff * labels
    softplus = jnp.maximum(x, 0.0) + jnp.log(1.0 + jnp.exp(-jnp.abs(x)))
    term = jnp.where(labels == 0.0, diff * diff, softplus)
    acc_ref[...] += term * w           # pure VPU adds; cross-lane reduction deferred

    @pl.when(step == pl.num_programs(1) - 1)
    def _():
        out_ref[0] = acc_ref[...]


def ranking_loss_batched(data):
    """data: (4, R, 128) float32 planes [iA, iB, labels, weight] -> weighted loss sum."""
    _, R, _ = data.shape               # R is a power of two >= 8
    tr = min(R, 1024)                  # power-of-two divisor of R; (4, tr, 128) block = 2 MiB
    steps_total = R // tr
    ncores = 2 if steps_total >= 2 else 1          # shard the reduction over v7x's 2 TCs
    steps_per_core = steps_total // ncores

    in_spec = pl.BlockSpec((4, tr, 128),
                           lambda core, s: (0, core * steps_per_core + s, 0))
    out_spec = pl.BlockSpec((1, tr, 128), lambda core, s: (core, 0, 0))
    partials = pl.pallas_call(
        _ranking_loss_kernel,
        out_shape=jax.ShapeDtypeStruct((ncores, tr, 128), jnp.float32),
        grid=(ncores, steps_per_core),
        in_specs=[in_spec],
        out_specs=out_spec,
        scratch_shapes=[pltpu.VMEM((tr, 128), jnp.float32)],
        compiler_params=pltpu.CompilerParams(
            dimension_semantics=("parallel", "arbitrary")),
    )(data)
    # single cross-lane reduction, once, outside the hot loop
    return jnp.sum(partials)


# --------------------------------------------------------------------------- #
# Glue: edge-guided sampling (data-dependent shapes -> host numpy) + gc stand-in
# --------------------------------------------------------------------------- #
class GeometryStub:
    """Deterministic stand-in for the external `gc` geometry helper."""
    # TODO(synk): real gc.compute_point_depth_for_edge projects calibrated 3D geometry;
    # here depth is looked up from the sparse target depth map instead.
    def __init__(self, target_flat, w, filter_depth):
        self.t = np.asarray(target_flat, dtype=np.float64)
        self.w = w
        self.filter_depth = filter_depth

    def compute_point_depth_for_edge(self, row, col):
        idx = row * self.w + col
        depth = self.t[idx]
        mask = depth > self.filter_depth
        return depth, mask


def edge_guided_sampling(inputs_i, edges_i, acos_i, asin_i, masks_i, h, w, gc, rng):
    """Host-side sampling (data-dependent shapes). inputs_i: (c, h*w) numpy."""
    edges = np.asarray(edges_i)
    acos = np.asarray(acos_i)
    asin = np.asarray(asin_i)
    masks_np = np.asarray(masks_i)

    edges_mask = edges >= edges.max() * 0.1
    edges_loc = np.nonzero(edges_mask)[0]
    acos_edge = acos[edges_mask]
    asin_edge = asin[edges_mask]
    minlen = edges_loc.shape[0]
    sample_num = minlen // 10
    if sample_num == 0:
        return None  # degenerate: reference would NaN; demo shapes never hit this

    index_anchors = rng.randint(0, minlen, size=(sample_num,))
    abs_cos = acos_edge[index_anchors].astype(np.float64)   # |cos theta| at the anchors
    abs_sin = asin_edge[index_anchors].astype(np.float64)   # |sin theta| at the anchors
    flat_anchors = edges_loc[index_anchors]
    row_anchors = flat_anchors // w                          # ind2sub
    col_anchors = flat_anchors - row_anchors * w

    distance_matrix = rng.randint(3, 20, size=(4, sample_num)).astype(np.float64)
    pos_or_neg = np.ones((4, sample_num), dtype=np.float64)
    pos_or_neg[:2, :] = -1.0
    distance_matrix = distance_matrix * pos_or_neg

    col = col_anchors[None, :].astype(np.int64) + np.round(
        distance_matrix * abs_cos[None, :]).astype(np.int64)
    row = row_anchors[None, :].astype(np.int64) + np.round(
        distance_matrix * abs_sin[None, :]).astype(np.int64)
    col = np.clip(col, 0, w - 1)
    row = np.clip(row, 0, h - 1)

    depth, mask_tmp = gc.compute_point_depth_for_edge(row, col)
    mask = np.all(mask_tmp, axis=0)
    if not mask.any():
        return None

    a = (row[0] * w + col[0])[mask]                          # sub2ind
    b = (row[1] * w + col[1])[mask]
    c = (row[2] * w + col[2])[mask]
    d = (row[3] * w + col[3])[mask]
    A = np.concatenate([a, b, c])
    B = np.concatenate([b, c, d])

    inputs_A = inputs_i[:, A]                                # (c, M)
    inputs_B = inputs_i[:, B]
    targets_A = np.concatenate([depth[0][mask], depth[1][mask], depth[2][mask]])
    targets_B = np.concatenate([depth[1][mask], depth[2][mask], depth[3][mask]])
    masks_A = masks_np[A]
    masks_B = masks_np[B]
    return inputs_A, inputs_B, targets_A, targets_B, masks_A, masks_B


# --------------------------------------------------------------------------- #
# Forward pass
# --------------------------------------------------------------------------- #
def edge_ranking_loss(inputs, targets, img_target, seed=0):
    """inputs, targets: (n, c, h, w) predicted / sparse depth.  img_target: (n, 3, H0, W0)."""
    masks = (targets > MASK_VALUE).astype(jnp.float32)
    n, c, h, w = targets.shape

    # F.interpolate(img_target, (h, w), mode='bilinear', align_corners=False)
    images = jax.image.resize(
        img_target, (img_target.shape[0], img_target.shape[1], h, w), method="bilinear")
    img0 = images[:, 0]                                      # getEdge uses channel 0 when c==3

    edges, abs_cos, abs_sin = sobel_edges(img0)              # Pallas kernel 1

    inputs_np = np.asarray(inputs.reshape(n, c, -1))
    masks_np = np.asarray(masks.reshape(n, -1))
    edges_np = np.asarray(edges.reshape(n, -1))
    acos_np = np.asarray(abs_cos.reshape(n, -1))
    asin_np = np.asarray(abs_sin.reshape(n, -1))
    targets_np = np.asarray(targets.reshape(n, c, -1))

    hi = 1.0 + SIGMA
    lo = 1.0 / (1.0 + SIGMA)
    rng = np.random.RandomState(seed)
    pieces = []
    for i in range(n):
        gc = GeometryStub(targets_np[i, 0], w, FILTER_DEPTH)
        sampled = edge_guided_sampling(
            inputs_np[i], edges_np[i], acos_np[i], asin_np[i], masks_np[i], h, w, gc, rng)
        if sampled is None:
            continue
        inA, inB, tgA, tgB, mkA, mkB = sampled
        m = tgA.shape[0]
        # labels / mask_eq computed on host in float64 (the reference runs this in double);
        # mask_eq == (labels == 0), so the kernel only needs labels.
        ratio = (tgA.astype(np.float64) + 1e-6) / (tgB.astype(np.float64) + 1e-6)
        labels = np.where(ratio >= hi, 1.0, 0.0) + np.where(ratio <= lo, -1.0, 0.0)
        # fold the per-sample 1/(c*M) means and the consistency mask into one weight:
        # sum(weight * term) == mean(equal_loss) + mean(unequal_loss) of the reference.
        wgt = np.broadcast_to((mkA * mkB).astype(np.float64) / float(c * m), (c, m))
        pieces.append((inA.ravel(), inB.ravel(),
                       np.broadcast_to(labels, (c, m)).ravel(),
                       wgt.ravel()))
    if not pieces:
        return jnp.zeros((), jnp.float32)

    cat = [np.concatenate([p[k] for p in pieces]) for k in range(4)]
    total = cat[0].shape[0]
    # pad to a power-of-two bucket (>= 1024) so the pallas_call compile-caches across calls;
    # padded elements have labels == 0 and weight == 0 -> contribute exactly 0.
    bucket = max(1024, pl.next_power_of_2(int(total)))
    pad = bucket - total
    data = np.stack([np.pad(np.asarray(x, dtype=np.float32), (0, pad)) for x in cat])
    data = jnp.asarray(data.reshape(4, bucket // 128, 128))

    loss_sum = ranking_loss_batched(data)                    # Pallas kernel 2 (one call total)
    return loss_sum / n


if __name__ == "__main__":
    key = jax.random.PRNGKey(0)
    k1, k2, k3 = jax.random.split(key, 3)
    n, c, h, w = 2, 1, 32, 128
    inputs = jax.random.uniform(k1, (n, c, h, w), jnp.float32, minval=0.5, maxval=5.0)
    targets = jax.random.uniform(k2, (n, c, h, w), jnp.float32, minval=0.5, maxval=5.0)
    img_target = jax.random.uniform(k3, (n, 3, 64, 256), jnp.float32)

    loss = edge_ranking_loss(inputs, targets, img_target)
    loss = jax.block_until_ready(loss)
    assert jnp.isfinite(loss)
    print("KERNEL_OK")
</pallas_src>

<mosaic_0001>
module attributes {stable_mosaic.version = 11 : i64} {
  func.func @_sobel_kernel(%arg0: i32, %arg1: memref<1x32x128xf32, #tpu.memory_space<vmem>>, %arg2: memref<1x32x128xf32, #tpu.memory_space<vmem>>, %arg3: memref<1x32x128xf32, #tpu.memory_space<vmem>>, %arg4: memref<1x32x128xf32, #tpu.memory_space<vmem>>) attributes {dimension_semantics = [#tpu.dimension_semantics<parallel>], iteration_bounds = array<i64: 2>, scalar_prefetch = 0 : i64, scratch_operands = 0 : i64, tpu.core_type = #tpu.core_type<tc>, window_params = [{transform_indices = @transform_0, window_bounds = array<i64: 1, 32, 128>}, {transform_indices = @transform_1, window_bounds = array<i64: 1, 32, 128>}, {transform_indices = @transform_2, window_bounds = array<i64: 1, 32, 128>}, {transform_indices = @transform_3, window_bounds = array<i64: 1, 32, 128>}]} {
    %c0 = arith.constant 0 : index
    %c0_0 = arith.constant 0 : index
    %c0_1 = arith.constant 0 : index
    %0 = vector.load %arg1[%c0, %c0_0, %c0_1] : memref<1x32x128xf32, #tpu.memory_space<vmem>>, vector<1x32x128xf32>
    %1 = vector.shape_cast %0 : vector<1x32x128xf32> to vector<32x128xf32>
    %c1_i32 = arith.constant 1 : i32
    %2 = tpu.dynamic_rotate %1 by %c1_i32 dim 0 : vector<32x128xf32>, i32 -> vector<32x128xf32>
    %c31_i32 = arith.constant 31 : i32
    %3 = tpu.dynamic_rotate %1 by %c31_i32 dim 0 : vector<32x128xf32>, i32 -> vector<32x128xf32>
    %cst = arith.constant 2.000000e+00 : f32
    %4 = vector.broadcast %cst : f32 to vector<32x128xf32>
    %5 = arith.mulf %4, %1 : vector<32x128xf32>
    %6 = arith.addf %2, %5 : vector<32x128xf32>
    %7 = arith.addf %6, %3 : vector<32x128xf32>
    %8 = arith.subf %2, %3 : vector<32x128xf32>
    %c127_i32 = arith.constant 127 : i32
    %9 = tpu.dynamic_rotate %7 by %c127_i32 dim 1 : vector<32x128xf32>, i32 -> vector<32x128xf32>
    %c1_i32_2 = arith.constant 1 : i32
    %10 = tpu.dynamic_rotate %7 by %c1_i32_2 dim 1 : vector<32x128xf32>, i32 -> vector<32x128xf32>
    %11 = arith.subf %9, %10 : vector<32x128xf32>
    %c1_i32_3 = arith.constant 1 : i32
    %12 = tpu.dynamic_rotate %8 by %c1_i32_3 dim 1 : vector<32x128xf32>, i32 -> vector<32x128xf32>
    %cst_4 = arith.constant 2.000000e+00 : f32
    %13 = vector.broadcast %cst_4 : f32 to vector<32x128xf32>
    %14 = arith.mulf %13, %8 : vector<32x128xf32>
    %15 = arith.addf %12, %14 : vector<32x128xf32>
    %c127_i32_5 = arith.constant 127 : i32
    %16 = tpu.dynamic_rotate %8 by %c127_i32_5 dim 1 : vector<32x128xf32>, i32 -> vector<32x128xf32>
    %17 = arith.addf %15, %16 : vector<32x128xf32>
    %18 = tpu.iota {dimensions = array<i32: 0>} : vector<32x128xi32>
    %19 = tpu.iota {dimensions = array<i32: 1>} : vector<32x128xi32>
    %c1_i32_6 = arith.constant 1 : i32
    %20 = vector.broadcast %c1_i32_6 : i32 to vector<32x128xi32>
    %21 = arith.cmpi sge, %18, %20 : vector<32x128xi32>
    %c31_i32_7 = arith.constant 31 : i32
    %22 = vector.broadcast %c31_i32_7 : i32 to vector<32x128xi32>
    %23 = arith.cmpi slt, %18, %22 : vector<32x128xi32>
    %24 = arith.andi %21, %23 : vector<32x128xi1>
    %c1_i32_8 = arith.constant 1 : i32
    %25 = vector.broadcast %c1_i32_8 : i32 to vector<32x128xi32>
    %26 = arith.cmpi sge, %19, %25 : vector<32x128xi32>
    %27 = arith.andi %24, %26 : vector<32x128xi1>
    %c127_i32_9 = arith.constant 127 : i32
    %28 = vector.broadcast %c127_i32_9 : i32 to vector<32x128xi32>
    %29 = arith.cmpi slt, %19, %28 : vector<32x128xi32>
    %30 = arith.andi %27, %29 : vector<32x128xi1>
    %31 = arith.mulf %11, %11 : vector<32x128xf32>
    %32 = arith.mulf %17, %17 : vector<32x128xf32>
    %33 = arith.addf %31, %32 : vector<32x128xf32>
    %34 = math.sqrt %33 : vector<32x128xf32>
    %cst_10 = arith.constant 0.000000e+00 : f32
    %35 = vector.broadcast %cst_10 : f32 to vector<32x128xf32>
    %36 = arith.select %30, %34, %35 : vector<32x128xi1>, vector<32x128xf32>
    %cst_11 = arith.constant 0.000000e+00 : f32
    %37 = vector.broadcast %cst_11 : f32 to vector<32x128xf32>
    %38 = arith.cmpf ogt, %36, %37 : vector<32x128xf32>
    %cst_12 = arith.constant 1.000000e+00 : f32
    %39 = vector.broadcast %cst_12 : f32 to vector<32x128xf32>
    %40 = arith.select %38, %36, %39 : vector<32x128xi1>, vector<32x128xf32>
    %41 = tpu.reciprocal %40 {approx = true} : vector<32x128xf32> -> vector<32x128xf32>
    %c0_13 = arith.constant 0 : index
    %c0_14 = arith.constant 0 : index
    %c0_15 = arith.constant 0 : index
    %42 = vector.load %arg2[%c0_13, %c0_14, %c0_15] : memref<1x32x128xf32, #tpu.memory_space<vmem>>, vector<1x32x128xf32>
    %43 = vector.shape_cast %42 : vector<1x32x128xf32> to vector<32x128xf32>
    %44 = vector.shape_cast %36 : vector<32x128xf32> to vector<1x32x128xf32>
    tpu.vector_store %arg2[%c0_13, %c0_14, %c0_15], %44 {strides = array<i32>} : memref<1x32x128xf32, #tpu.memory_space<vmem>>, vector<1x32x128xf32>,
    %45 = math.absf %11 : vector<32x128xf32>
    %46 = arith.mulf %45, %41 : vector<32x128xf32>
    %cst_16 = arith.constant 1.000000e+00 : f32
    %47 = vector.broadcast %cst_16 : f32 to vector<32x128xf32>
    %48 = arith.select %38, %46, %47 : vector<32x128xi1>, vector<32x128xf32>
    %c0_17 = arith.constant 0 : index
    %c0_18 = arith.constant 0 : index
    %c0_19 = arith.constant 0 : index
    %49 = vector.load %arg3[%c0_17, %c0_18, %c0_19] : memref<1x32x128xf32, #tpu.memory_space<vmem>>, vector<1x32x128xf32>
    %50 = vector.shape_cast %49 : vector<1x32x128xf32> to vector<32x128xf32>
    %51 = vector.shape_cast %48 : vector<32x128xf32> to vector<1x32x128xf32>
    tpu.vector_store %arg3[%c0_17, %c0_18, %c0_19], %51 {strides = array<i32>} : memref<1x32x128xf32, #tpu.memory_space<vmem>>, vector<1x32x128xf32>,
    %52 = math.absf %17 : vector<32x128xf32>
    %53 = arith.mulf %52, %41 : vector<32x128xf32>
    %cst_20 = arith.constant 0.000000e+00 : f32
    %54 = vector.broadcast %cst_20 : f32 to vector<32x128xf32>
    %55 = arith.select %38, %53, %54 : vector<32x128xi1>, vector<32x128xf32>
    %c0_21 = arith.constant 0 : index
    %c0_22 = arith.constant 0 : index
    %c0_23 = arith.constant 0 : index
    %56 = vector.load %arg4[%c0_21, %c0_22, %c0_23] : memref<1x32x128xf32, #tpu.memory_space<vmem>>, vector<1x32x128xf32>
    %57 = vector.shape_cast %56 : vector<1x32x128xf32> to vector<32x128xf32>
    %58 = vector.shape_cast %55 : vector<32x128xf32> to vector<1x32x128xf32>
    tpu.vector_store %arg4[%c0_21, %c0_22, %c0_23], %58 {strides = array<i32>} : memref<1x32x128xf32, #tpu.memory_space<vmem>>, vector<1x32x128xf32>,
    return
  }
  func.func @transform_0(%arg0: i32) -> (i32, i32, i32) {
    %c0_i32 = arith.constant 0 : i32
    %c0_i32_0 = arith.constant 0 : i32
    %c0_i32_1 = arith.constant 0 : i32
    return %arg0, %c0_i32, %c0_i32_0 : i32, i32, i32
  }
  func.func @transform_1(%arg0: i32) -> (i32, i32, i32) {
    %c0_i32 = arith.constant 0 : i32
    %c0_i32_0 = arith.constant 0 : i32
    %c0_i32_1 = arith.constant 0 : i32
    return %arg0, %c0_i32, %c0_i32_0 : i32, i32, i32
  }
  func.func @transform_2(%arg0: i32) -> (i32, i32, i32) {
    %c0_i32 = arith.constant 0 : i32
    %c0_i32_0 = arith.constant 0 : i32
    %c0_i32_1 = arith.constant 0 : i32
    return %arg0, %c0_i32, %c0_i32_0 : i32, i32, i32
  }
  func.func @transform_3(%arg0: i32) -> (i32, i32, i32) {
    %c0_i32 = arith.constant 0 : i32
    %c0_i32_0 = arith.constant 0 : i32
    %c0_i32_1 = arith.constant 0 : i32
    return %arg0, %c0_i32, %c0_i32_0 : i32, i32, i32
  }
}

</mosaic_0001>

<llo_original>
// kernel: tpu_custom_call.1
$region0: #{tpu_custom_call.1}
  #allocation0 [shape = 'u32[]', space=smem, size = 0x4, offset = 0x4, fixed_abs, tag = 'smem constant byte address 0x4 - core index']
  #allocation1 [shape = 'u32[144,128]{1,0:T(1,128)}', space=vmem, size = 0x12000, scoped, tag = 'internal scratch']
  %s0 = inlined_call_operand.hbm [shape: f32[2,32,128], index: 0, kind: input, shape index: {}]
  %s1 = inlined_call_operand.hbm [shape: f32[2,32,128], index: 1, kind: output, shape index: {0}]
  %s2 = inlined_call_operand.hbm [shape: f32[2,32,128], index: 2, kind: output, shape index: {1}]
  %s3 = inlined_call_operand.hbm [shape: f32[2,32,128], index: 3, kind: output, shape index: {2}]
  %4 = xla_tuple %s1, %s2, %s3
  %s5 = sld [smem:[#allocation0]]
  $region57: #{tpu_custom_call.1} parent=0
    _
  %s7 = ssub.s32 1, %s5
  %s8 = scalar_select 0, %s7, %s5
  $region1: #{tpu_custom_call.1} parent=0
    #allocation2 [shape = 'u8[32768]{0}', space=vmem, size = 0x8000, scoped, tag = 'input window, operand 0']
    #allocation3 [shape = 's32[2]{0}', space=sflag, size = 0x8, scoped, tag = 'scoped memory for tpu_custom_call.1']
    #allocation4 [shape = 's32[2]{0}', space=sflag, size = 0x8, scoped, tag = 'scoped memory for tpu_custom_call.1']
    #allocation5 [shape = 'u8[32768]{0}', space=vmem, size = 0x8000, scoped, tag = 'output window, operand 0']
    #allocation6 [shape = 'u8[32768]{0}', space=vmem, size = 0x8000, scoped, tag = 'output window, operand 1']
    #allocation7 [shape = 's32[2]{0}', space=sflag, size = 0x8, scoped, tag = 'scoped memory for tpu_custom_call.1']
    #allocation8 [shape = 'u8[32768]{0}', space=vmem, size = 0x8000, scoped, tag = 'output window, operand 2']
    %9 = vsyncpa [#allocation3], 0
    %s10 = scalar_lea.sflag [#allocation3], 1
    %11 = vsyncpa %s10, 0
    %12 = vsyncpa [#allocation4], 0
    %s13 = scalar_lea.sflag [#allocation4], 1
    %14 = vsyncpa %s13, 0
    %15 = vsyncpa [#allocation7], 0
    %s16 = scalar_lea.sflag [#allocation7], 1
    %17 = vsyncpa %s16, 0
    loop: start=0, step=1, limit=4
    $region2: #{tpu_custom_call.1} parent=1 // loop_pre_header
      _
    $region3: #{tpu_custom_call.1} parent=1 // loop_header
      %s19 = sphi 0, %s23
      %p20 = scmp.ge.s32.totalorder %s19, 4
      %s29 = sphi 0, %s31
      %s32 = sphi 0, %s29
      %s33 = sphi 0, %s32
      %s49 = sphi 0, %s33
      %s55 = sphi 0, %s57
      %s58 = sphi 0, %s55
      %s59 = sphi 0, %s58
      %s75 = sphi 0, %s59
      %s81 = sphi 0, %s83
      %s84 = sphi 0, %s81
      %s85 = sphi 0, %s84
      %s101 = sphi 0, %s85
      %s107 = sphi 0, %s109
      %s110 = sphi 0, %s107
      %s111 = sphi 0, %s110
      %s127 = sphi 0, %s111
    $region4: #{tpu_custom_call.1} parent=1 // loop_header_branch
      %22 = sbr.rel (%p20) target = $region8
    $region5: #{tpu_custom_call.1} parent=1 // loop_body
      %s24 = ssub.s32 %s19, 1
      %s25 = ssub.s32 %s19, 2
      %s26 = sadd.s32 %s19, 1
      %s27 = ssub.s32 %s19, %s26
      %p28 = scmp.eq.s32.totalorder %s27, 0
      %s30 = sadd.s32 %s29, 1
      %s31 = scalar_select %p28, %s29, %s30
      %p34 = pneg %p28
      %p35 = scmp.eq.s32.totalorder %s19, 1
      %p36 = por %p34, %p35
      %p37 = scmp.ne.s32.totalorder %s29, %s32
      %p38 = scmp.eq.s32.totalorder %s19, 0
      %p39 = por %p37, %p38
      %p40 = scmp.ne.s32.totalorder %s29, %s32
      %p41 = scmp.eq.s32.totalorder %s24, 1
      %p42 = por %p40, %p41
      %p43 = scmp.ne.s32.totalorder %s32, %s33
      %p44 = scmp.eq.s32.totalorder %s24, 0
      %p45 = por %p43, %p44
      %p46 = scmp.ne.s32.totalorder %s32, %s33
      %p47 = scmp.eq.s32.totalorder %s25, 1
      %p48 = por %p46, %p47
      %p50 = scmp.ne.s32.totalorder %s33, %s49
      %p51 = scmp.eq.s32.totalorder %s25, 0
      %p52 = por %p50, %p51
      %s53 = ssub.s32 %s19, %s26
      %p54 = scmp.eq.s32.totalorder %s53, 0
      %s56 = sadd.s32 %s55, 1
      %s57 = scalar_select %p54, %s55, %s56
      %p60 = pneg %p54
      %p61 = scmp.eq.s32.totalorder %s19, 1
      %p62 = por %p60, %p61
      %p63 = scmp.ne.s32.totalorder %s55, %s58
      %p64 = scmp.eq.s32.totalorder %s19, 0
      %p65 = por %p63, %p64
      %p66 = scmp.ne.s32.totalorder %s55, %s58
      %p67 = scmp.eq.s32.totalorder %s24, 1
      %p68 = por %p66, %p67
      %p69 = scmp.ne.s32.totalorder %s58, %s59
      %p70 = scmp.eq.s32.totalorder %s24, 0
      %p71 = por %p69, %p70
      %p72 = scmp.ne.s32.totalorder %s58, %s59
      %p73 = scmp.eq.s32.totalorder %s25, 1
      %p74 = por %p72, %p73
      %p76 = scmp.ne.s32.totalorder %s59, %s75
      %p77 = scmp.eq.s32.totalorder %s25, 0
      %p78 = por %p76, %p77
      %s79 = ssub.s32 %s19, %s26
      %p80 = scmp.eq.s32.totalorder %s79, 0
      %s82 = sadd.s32 %s81, 1
      %s83 = scalar_select %p80, %s81, %s82
      %p86 = pneg %p80
      %p87 = scmp.eq.s32.totalorder %s19, 1
      %p88 = por %p86, %p87
      %p89 = scmp.ne.s32.totalorder %s81, %s84
      %p90 = scmp.eq.s32.totalorder %s19, 0
      %p91 = por %p89, %p90
      %p92 = scmp.ne.s32.totalorder %s81, %s84
      %p93 = scmp.eq.s32.totalorder %s24, 1
      %p94 = por %p92, %p93
      %p95 = scmp.ne.s32.totalorder %s84, %s85
      %p96 = scmp.eq.s32.totalorder %s24, 0
      %p97 = por %p95, %p96
      %p98 = scmp.ne.s32.totalorder %s84, %s85
      %p99 = scmp.eq.s32.totalorder %s25, 1
      %p100 = por %p98, %p99
      %p102 = scmp.ne.s32.totalorder %s85, %s101
      %p103 = scmp.eq.s32.totalorder %s25, 0
      %p104 = por %p102, %p103
      %s105 = ssub.s32 %s19, %s26
      %p106 = scmp.eq.s32.totalorder %s105, 0
      %s108 = sadd.s32 %s107, 1
      %s109 = scalar_select %p106, %s107, %s108
      %p112 = pneg %p106
      %p113 = scmp.eq.s32.totalorder %s19, 1
      %p114 = por %p112, %p113
      %p115 = scmp.ne.s32.totalorder %s107, %s110
      %p116 = scmp.eq.s32.totalorder %s19, 0
      %p117 = por %p115, %p116
      %p118 = scmp.ne.s32.totalorder %s107, %s110
      %p119 = scmp.eq.s32.totalorder %s24, 1
      %p120 = por %p118, %p119
      %p121 = scmp.ne.s32.totalorder %s110, %s111
      %p122 = scmp.eq.s32.totalorder %s24, 0
      %p123 = por %p121, %p122
      %p124 = scmp.ne.s32.totalorder %s110, %s111
      %p125 = scmp.eq.s32.totalorder %s25, 1
      %p126 = por %p124, %p125
      %p128 = scmp.ne.s32.totalorder %s111, %s127
      %p129 = scmp.eq.s32.totalorder %s25, 0
      %p130 = por %p128, %p129
      %p131 = scmp.le.s32.totalorder 1, %s19
      %p132 = scmp.lt.s32.totalorder %s19, 3
      %p133 = pnand %p131, %p132
      %p134 = pneg %p133
      // Predicated region
      $region9: #{tpu_custom_call.1} parent=5 // pred_check
        _
      $region10: #{tpu_custom_call.1} parent=5 // pred_check_branch
        %136 = sbr.rel (%p133) target = $region12
      $region11: #{tpu_custom_call.1} parent=5 // pred_region
        %s137 = ssub.s32 %s19, 1
      $region12: #{tpu_custom_call.1} parent=5 // pred_fallthru
        _
      %p138 = scmp.lt.s32.totalorder %s19, 2
      // Predicated region
      $region13: #{tpu_custom_call.1} parent=5 // pred_check
        %p139 = pneg %p138
      $region14: #{tpu_custom_call.1} parent=5 // pred_check_branch
        %141 = sbr.rel (%p139) target = $region16
      $region15: #{tpu_custom_call.1} parent=5 // pred_region
        // Predicated region
        $region17: #{tpu_custom_call.1} parent=15 // pred_check
          %p142 = pneg %p39
        $region18: #{tpu_custom_call.1} parent=15 // pred_check_branch
          %144 = sbr.rel (%p142) target = $region20
        $region19: #{tpu_custom_call.1} parent=15 // pred_region
          %s145 = sand.u32 %s29, 1
          %s146 = scalar_lea.sflag [#allocation3], %s145
          %s147 = sand.u32 %s29, 1
          %s148 = smul.addr %s147, 32
          %s149 = scalar_lea.vmem [#allocation2], %s148
          %s151 = ssub.s32 512, 512
          %152 = vsyncadd %s146, %s151
          %s153 = smul.addr %s19, 4
          %s154 = smul.addr %s153, 128
          %s155 = scalar_lea.hbm %s0, %s154
          %s156 = sshll.u32 %s149, 4
          %s157 = int_to_ptr.vmem [resolvable:$true] %s156
          %162 = dma.hbm_to_vmem [thread:$0]  %s155, 512, %s157, %s146, 128, 128, 8
        $region20: #{tpu_custom_call.1} parent=15 // pred_fallthru
          _
      $region16: #{tpu_custom_call.1} parent=5 // pred_fallthru
        _
      %p163 = scmp.le.s32.totalorder 1, %s19
      %p164 = scmp.lt.s32.totalorder %s19, 3
      %p165 = pnand %p163, %p164
      %p166 = pneg %p165
      // Predicated region
      $region21: #{tpu_custom_call.1} parent=5 // pred_check
        _
      $region22: #{tpu_custom_call.1} parent=5 // pred_check_branch
        %168 = sbr.rel (%p165) target = $region24
      $region23: #{tpu_custom_call.1} parent=5 // pred_region
        %s169 = ssub.s32 %s19, 1
        %s170 = sand.u32 %s32, 1
        %s171 = scalar_lea.sflag [#allocation3], %s170
        %s172 = sand.u32 %s32, 1
        %s173 = smul.addr %s172, 32
        %s174 = scalar_lea.vmem [#allocation2], %s173
        // Predicated region
        $region25: #{tpu_custom_call.1} parent=23 // pred_check
          %p175 = pneg %p45
        $region26: #{tpu_custom_call.1} parent=23 // pred_check_branch
          %177 = sbr.rel (%p175) target = $region28
        $region27: #{tpu_custom_call.1} parent=23 // pred_region
          %178 = dma.done %s171, 512
        $region28: #{tpu_custom_call.1} parent=23 // pred_fallthru
          _
        %s179 = sand.u32 %s32, 1
        %s180 = scalar_lea.sflag [#allocation3], %s179
        %s181 = sand.u32 %s32, 1
        %s182 = smul.addr %s181, 32
        %s183 = scalar_lea.vmem [#allocation2], %s182
        %p184 = pneg %p45
        %p185 = pneg %p42
        %p186 = pneg %p71
        %p187 = pneg %p68
        %s188 = sand.u32 %s58, 1
        %s189 = scalar_lea.sflag [#allocation4], %s188
        %s190 = sand.u32 %s58, 1
        %s191 = smul.addr %s190, 32
        %s192 = scalar_lea.vmem [#allocation5], %s191
        %p193 = pneg %p97
        %p194 = pneg %p94
        %s195 = sand.u32 %s24, 1
        %s196 = scalar_lea.sflag [#allocation7], %s195
        %s197 = sand.u32 %s84, 1
        %s198 = smul.addr %s197, 32
        %s199 = scalar_lea.vmem [#allocation6], %s198
        %p200 = pneg %p123
        %p201 = pneg %p120
        %s202 = sand.u32 %s24, 1
        %s203 = scalar_lea.sflag [#allocation7], %s202
        %s204 = sand.u32 %s110, 1
        %s205 = smul.addr %s204, 32
        %s206 = scalar_lea.vmem [#allocation8], %s205
        %v207 = vld [vmem:[%s174] sm:$0xff]
        %v208 = vld [vmem:[%s174 + $0x8] sm:$0xff]
        %v209 = vld [vmem:[%s174 + $0x10] sm:$0xff]
        %v210 = vld [vmem:[%s174 + $0x18] sm:$0xff]
        %v211 = vrot.slane %v207, 7
        %v212 = vrot.slane %v208, 7
        %v213 = vrot.slane %v209, 7
        %v214 = vrot.slane %v210, 7
        %v215 = vlaneseq
        %v216 = vshrl.u32 %v215, 7
        %vm217 = vcmp.lt.s32.totalorder %v216, 1
        %v218 = vsel %vm217, %v213, %v214
        %v219 = vsel %vm217, %v212, %v213
        %v220 = vsel %vm217, %v211, %v212
        %v221 = vsel %vm217, %v214, %v211
        %v222 = vrot.slane %v207, 1
        %v223 = vrot.slane %v208, 1
        %v224 = vrot.slane %v209, 1
        %v225 = vrot.slane %v210, 1
        %vm226 = vcmp.lt.s32.totalorder %v216, 7
        %v227 = vsel %vm226, %v224, %v225
        %v228 = vsel %vm226, %v223, %v224
        %v229 = vsel %vm226, %v222, %v223
        %v230 = vsel %vm226, %v225, %v222
        %v231 = vmul.f32 %v207, 2.0
        %v232 = vmul.f32 %v208, 2.0
        %v233 = vmul.f32 %v209, 2.0
        %v234 = vmul.f32 %v210, 2.0
        %v235 = vadd.f32 %v221, %v231
        %v236 = vadd.f32 %v220, %v232
        %v237 = vadd.f32 %v219, %v233
        %v238 = vadd.f32 %v218, %v234
        %v239 = vadd.f32 %v235, %v229
        %v240 = vadd.f32 %v236, %v228
        %v241 = vadd.f32 %v237, %v227
        %v242 = vadd.f32 %v238, %v230
        %v243 = vsub.f32 %v221, %v229
        %v244 = vsub.f32 %v220, %v228
        %v245 = vsub.f32 %v219, %v227
        %v246 = vsub.f32 %v218, %v230
        %247 = vrot.lane.b32.xlu0 %v239, 127
        %v248 = vpop.permute.xlu0 %247
        %249 = vrot.lane.b32.xlu0 %v240, 127
        %v250 = vpop.permute.xlu0 %249
        %251 = vrot.lane.b32.xlu0 %v241, 127
        %v252 = vpop.permute.xlu0 %251
        %253 = vrot.lane.b32.xlu0 %v242, 127
        %v254 = vpop.permute.xlu0 %253
        %255 = vrot.lane.b32.xlu0 %v239, 1
        %v256 = vpop.permute.xlu0 %255
        %257 = vrot.lane.b32.xlu0 %v240, 1
        %v258 = vpop.permute.xlu0 %257
        %259 = vrot.lane.b32.xlu0 %v241, 1
        %v260 = vpop.permute.xlu0 %259
        %261 = vrot.lane.b32.xlu0 %v242, 1
        %v262 = vpop.permute.xlu0 %261
        %v263 = vsub.f32 %v248, %v256
        %v264 = vsub.f32 %v250, %v258
        %v265 = vsub.f32 %v252, %v260
        %v266 = vsub.f32 %v254, %v262
        %267 = vrot.lane.b32.xlu0 %v243, 1
        %v268 = vpop.permute.xlu0 %267
        %269 = vrot.lane.b32.xlu0 %v244, 1
        %v270 = vpop.permute.xlu0 %269
        %271 = vrot.lane.b32.xlu0 %v245, 1
        %v272 = vpop.permute.xlu0 %271
        %273 = vrot.lane.b32.xlu0 %v246, 1
        %v274 = vpop.permute.xlu0 %273
        %v275 = vmul.f32 %v243, 2.0
        %v276 = vmul.f32 %v244, 2.0
        %v277 = vmul.f32 %v245, 2.0
        %v278 = vmul.f32 %v246, 2.0
        %v279 = vadd.f32 %v268, %v275
        %v280 = vadd.f32 %v270, %v276
        %v281 = vadd.f32 %v272, %v277
        %v282 = vadd.f32 %v274, %v278
        %283 = vrot.lane.b32.xlu0 %v243, 127
        %v284 = vpop.permute.xlu0 %283
        %285 = vrot.lane.b32.xlu0 %v244, 127
        %v286 = vpop.permute.xlu0 %285
        %287 = vrot.lane.b32.xlu0 %v245, 127
        %v288 = vpop.permute.xlu0 %287
        %289 = vrot.lane.b32.xlu0 %v246, 127
        %v290 = vpop.permute.xlu0 %289
        %v291 = vadd.f32 %v279, %v284
        %v292 = vadd.f32 %v280, %v286
        %v293 = vadd.f32 %v281, %v288
        %v294 = vadd.f32 %v282, %v290
        %v295 = vadd.s32 %v216, 8
        %v296 = vadd.s32 %v216, 16
        %v297 = vadd.s32 %v216, 24
        %v298 = vlaneseq
        %v299 = vand.u32 %v298, 127
        %vm300 = vcmp.ge.s32.totalorder %v216, 1
        %vm301 = vcmp.ge.s32.totalorder %v295, 1
        %vm302 = vcmp.ge.s32.totalorder %v296, 1
        %vm303 = vcmp.ge.s32.totalorder %v297, 1
        %vm304 = vcmp.lt.s32.totalorder %v216, 31
        %vm305 = vcmp.lt.s32.totalorder %v295, 31
        %vm306 = vcmp.lt.s32.totalorder %v296, 31
        %vm307 = vcmp.lt.s32.totalorder %v297, 31
        %vm308 = vmand %vm300, %vm304
        %vm309 = vmand %vm301, %vm305
        %vm310 = vmand %vm302, %vm306
        %vm311 = vmand %vm303, %vm307
        %vm312 = vcmp.ge.s32.totalorder %v299, 1
        %vm313 = vmand %vm308, %vm312
        %vm314 = vmand %vm309, %vm312
        %vm315 = vmand %vm310, %vm312
        %vm316 = vmand %vm311, %vm312
        %vm317 = vcmp.lt.s32.totalorder %v299, 127
        %vm318 = vmand %vm313, %vm317
        %vm319 = vmand %vm314, %vm317
        %vm320 = vmand %vm315, %vm317
        %vm321 = vmand %vm316, %vm317
        %v322 = vmul.f32 %v263, %v263
        %v323 = vmul.f32 %v264, %v264
        %v324 = vmul.f32 %v265, %v265
        %v325 = vmul.f32 %v266, %v266
        %v326 = vmul.f32 %v291, %v291
        %v327 = vmul.f32 %v292, %v292
        %v328 = vmul.f32 %v293, %v293
        %v329 = vmul.f32 %v294, %v294
        %v330 = vadd.f32 %v322, %v326
        %v331 = vadd.f32 %v323, %v327
        %v332 = vadd.f32 %v324, %v328
        %v333 = vadd.f32 %v325, %v329
        %v334 = vrsqrt.pop %v330
        %v335 = vmul.f32 %v330, %v334
        %vm336 = vcmp.eq.f32.partialorder %v330, inf
        %v337 = vsel %vm336, %v330, %v335
        %vm338 = vcmp.eq.f32.partialorder %v330, 0.0
        %v339 = vand.u32 %v330, 2147483648
        %v340 = vsel %vm338, %v339, %v337
        %v341 = vrsqrt.pop %v331
        %v342 = vmul.f32 %v331, %v341
        %vm343 = vcmp.eq.f32.partialorder %v331, inf
        %v344 = vsel %vm343, %v331, %v342
        %vm345 = vcmp.eq.f32.partialorder %v331, 0.0
        %v346 = vand.u32 %v331, 2147483648
        %v347 = vsel %vm345, %v346, %v344
        %v348 = vrsqrt.pop %v332
        %v349 = vmul.f32 %v332, %v348
        %vm350 = vcmp.eq.f32.partialorder %v332, inf
        %v351 = vsel %vm350, %v332, %v349
        %vm352 = vcmp.eq.f32.partialorder %v332, 0.0
        %v353 = vand.u32 %v332, 2147483648
        %v354 = vsel %vm352, %v353, %v351
        %v355 = vrsqrt.pop %v333
        %v356 = vmul.f32 %v333, %v355
        %vm357 = vcmp.eq.f32.partialorder %v333, inf
        %v358 = vsel %vm357, %v333, %v356
        %vm359 = vcmp.eq.f32.partialorder %v333, 0.0
        %v360 = vand.u32 %v333, 2147483648
        %v361 = vsel %vm359, %v360, %v358
        %v362 = vsel %vm318, %v340, 0.0
        %v363 = vsel %vm319, %v347, 0.0
        %v364 = vsel %vm320, %v354, 0.0
        %v365 = vsel %vm321, %v361, 0.0
        %vm366 = vcmp.gt.f32.partialorder %v362, 0.0
        %vm367 = vcmp.gt.f32.partialorder %v363, 0.0
        %vm368 = vcmp.gt.f32.partialorder %v364, 0.0
        %vm369 = vcmp.gt.f32.partialorder %v365, 0.0
        %v370 = vsel %vm366, %v362, 1.0
        %v371 = vsel %vm367, %v363, 1.0
        %v372 = vsel %vm368, %v364, 1.0
        %v373 = vsel %vm369, %v365, 1.0
        %v374 = vrcp.pop %v370
        %v375 = vrcp.pop %v371
        %v376 = vrcp.pop %v372
        %v377 = vrcp.pop %v373
        %378 = vst [vmem:[%s192] sm:$0xff] %v362
        %379 = vst [vmem:[%s192 + $0x8] sm:$0xff] %v363
        %380 = vst [vmem:[%s192 + $0x10] sm:$0xff] %v364
        %381 = vst [vmem:[%s192 + $0x18] sm:$0xff] %v365
        %v382 = vand.u32 2147483647, %v263
        %v383 = vand.u32 2147483647, %v264
        %v384 = vand.u32 2147483647, %v265
        %v385 = vand.u32 2147483647, %v266
        %v386 = vmul.f32 %v382, %v374
        %v387 = vmul.f32 %v383, %v375
        %v388 = vmul.f32 %v384, %v376
        %v389 = vmul.f32 %v385, %v377
        %v390 = vsel %vm366, %v386, 1.0
        %v391 = vsel %vm367, %v387, 1.0
        %v392 = vsel %vm368, %v388, 1.0
        %v393 = vsel %vm369, %v389, 1.0
        %394 = vst [vmem:[%s199] sm:$0xff] %v390
        %395 = vst [vmem:[%s199 + $0x8] sm:$0xff] %v391
        %396 = vst [vmem:[%s199 + $0x10] sm:$0xff] %v392
        %397 = vst [vmem:[%s199 + $0x18] sm:$0xff] %v393
        %v398 = vand.u32 2147483647, %v291
        %v399 = vand.u32 2147483647, %v292
        %v400 = vand.u32 2147483647, %v293
        %v401 = vand.u32 2147483647, %v294
        %v402 = vmul.f32 %v398, %v374
        %v403 = vmul.f32 %v399, %v375
        %v404 = vmul.f32 %v400, %v376
        %v405 = vmul.f32 %v401, %v377
        %v406 = vsel %vm366, %v402, 0.0
        %v407 = vsel %vm367, %v403, 0.0
        %v408 = vsel %vm368, %v404, 0.0
        %v409 = vsel %vm369, %v405, 0.0
        %410 = vst [vmem:[%s206] sm:$0xff] %v406
        %411 = vst [vmem:[%s206 + $0x8] sm:$0xff] %v407
        %412 = vst [vmem:[%s206 + $0x10] sm:$0xff] %v408
        %413 = vst [vmem:[%s206 + $0x18] sm:$0xff] %v409
        %s414 = sand.u32 %s58, 1
        %s415 = scalar_lea.sflag [#allocation4], %s414
        %s416 = sand.u32 %s58, 1
        %s417 = smul.addr %s416, 32
        %s418 = scalar_lea.vmem [#allocation5], %s417
        %s419 = sand.u32 %s24, 1
        %s420 = scalar_lea.sflag [#allocation7], %s419
        %s421 = sand.u32 %s84, 1
        %s422 = smul.addr %s421, 32
        %s423 = scalar_lea.vmem [#allocation6], %s422
        %s424 = sand.u32 %s24, 1
        %s425 = scalar_lea.sflag [#allocation7], %s424
        %s426 = sand.u32 %s110, 1
        %s427 = smul.addr %s426, 32
        %s428 = scalar_lea.vmem [#allocation8], %s427
        // Predicated region
        $region29: #{tpu_custom_call.1} parent=23 // pred_check
          %p429 = pneg %p68
        $region30: #{tpu_custom_call.1} parent=23 // pred_check_branch
          %431 = sbr.rel (%p429) target = $region32
        $region31: #{tpu_custom_call.1} parent=23 // pred_region
          %s433 = ssub.s32 512, 512
          %434 = vsyncadd %s415, %s433
          %s435 = smul.addr %s24, 4
          %s436 = smul.addr %s435, 128
          %s437 = scalar_lea.hbm %s1, %s436
          %s438 = sshll.u32 %s418, 4
          %s439 = int_to_ptr.vmem [resolvable:$true] %s438
          %444 = dma.vmem_to_hbm [thread:$0]  %s439, 512, %s437, %s415, 128, 128, 8
        $region32: #{tpu_custom_call.1} parent=23 // pred_fallthru
          _
        // Predicated region
        $region33: #{tpu_custom_call.1} parent=23 // pred_check
          %p445 = pneg %p94
        $region34: #{tpu_custom_call.1} parent=23 // pred_check_branch
          %447 = sbr.rel (%p445) target = $region36
        $region35: #{tpu_custom_call.1} parent=23 // pred_region
          %s449 = ssub.s32 512, 512
          %450 = vsyncadd %s420, %s449
          %s451 = smul.addr %s24, 4
          %s452 = smul.addr %s451, 128
          %s453 = scalar_lea.hbm %s2, %s452
          %s454 = sshll.u32 %s423, 4
          %s455 = int_to_ptr.vmem [resolvable:$true] %s454
          %460 = dma.vmem_to_hbm [thread:$0]  %s455, 512, %s453, %s420, 128, 128, 8
        $region36: #{tpu_custom_call.1} parent=23 // pred_fallthru
          _
        // Predicated region
        $region37: #{tpu_custom_call.1} parent=23 // pred_check
          %p461 = pneg %p120
        $region38: #{tpu_custom_call.1} parent=23 // pred_check_branch
          %463 = sbr.rel (%p461) target = $region40
        $region39: #{tpu_custom_call.1} parent=23 // pred_region
          %s465 = ssub.s32 512, 512
          %466 = vsyncadd %s425, %s465
          %s467 = smul.addr %s24, 4
          %s468 = smul.addr %s467, 128
          %s469 = scalar_lea.hbm %s3, %s468
          %s470 = sshll.u32 %s428, 4
          %s471 = int_to_ptr.vmem [resolvable:$true] %s470
          %476 = dma.vmem_to_hbm [thread:$0]  %s471, 512, %s469, %s425, 128, 128, 8
        $region40: #{tpu_custom_call.1} parent=23 // pred_fallthru
          _
      $region24: #{tpu_custom_call.1} parent=5 // pred_fallthru
        _
      %p477 = scmp.le.s32.totalorder 2, %s19
      // Predicated region
      $region41: #{tpu_custom_call.1} parent=5 // pred_check
        %p478 = pneg %p477
      $region42: #{tpu_custom_call.1} parent=5 // pred_check_branch
        %480 = sbr.rel (%p478) target = $region44
      $region43: #{tpu_custom_call.1} parent=5 // pred_region
        %s481 = ssub.s32 %s19, 2
        // Predicated region
        $region45: #{tpu_custom_call.1} parent=43 // pred_check
          %p482 = pneg %p74
        $region46: #{tpu_custom_call.1} parent=43 // pred_check_branch
          %484 = sbr.rel (%p482) target = $region48
        $region47: #{tpu_custom_call.1} parent=43 // pred_region
          %s485 = sand.u32 %s59, 1
          %s486 = scalar_lea.sflag [#allocation4], %s485
          %s487 = sand.u32 %s59, 1
          %s488 = smul.addr %s487, 32
          %s489 = scalar_lea.vmem [#allocation5], %s488
          %490 = dma.done %s486, 512
        $region48: #{tpu_custom_call.1} parent=43 // pred_fallthru
          _
        // Predicated region
        $region49: #{tpu_custom_call.1} parent=43 // pred_check
          %p491 = pneg %p100
        $region50: #{tpu_custom_call.1} parent=43 // pred_check_branch
          %493 = sbr.rel (%p491) target = $region52
        $region51: #{tpu_custom_call.1} parent=43 // pred_region
          %s494 = sand.u32 %s25, 1
          %s495 = scalar_lea.sflag [#allocation7], %s494
          %s496 = sand.u32 %s85, 1
          %s497 = smul.addr %s496, 32
          %s498 = scalar_lea.vmem [#allocation6], %s497
          %499 = dma.done %s495, 512
        $region52: #{tpu_custom_call.1} parent=43 // pred_fallthru
          _
        // Predicated region
        $region53: #{tpu_custom_call.1} parent=43 // pred_check
          %p500 = pneg %p126
        $region54: #{tpu_custom_call.1} parent=43 // pred_check_branch
          %502 = sbr.rel (%p500) target = $region56
        $region55: #{tpu_custom_call.1} parent=43 // pred_region
          %s503 = sand.u32 %s25, 1
          %s504 = scalar_lea.sflag [#allocation7], %s503
          %s505 = sand.u32 %s111, 1
          %s506 = smul.addr %s505, 32
          %s507 = scalar_lea.vmem [#allocation8], %s506
          %508 = dma.done %s504, 512
        $region56: #{tpu_custom_call.1} parent=43 // pred_fallthru
          _
      $region44: #{tpu_custom_call.1} parent=5 // pred_fallthru
        _
    $region6: #{tpu_custom_call.1} parent=1 // loop_footer
      %s23 = sadd.s32 1, %s19
    $region7: #{tpu_custom_call.1} parent=1 // loop_footer_branch
      %18 = sbr.rel target = $region3
    $region8: #{tpu_custom_call.1} parent=1 // loop_exit
      _
    %509 = vsyncpa [#allocation3], 1
    %s510 = scalar_lea.sflag [#allocation3], 1
    %511 = vsyncpa %s510, 1
    %512 = vsyncpa [#allocation4], 1
    %s513 = scalar_lea.sflag [#allocation4], 1
    %514 = vsyncpa %s513, 1
    %515 = vsyncpa [#allocation7], 1
    %s516 = scalar_lea.sflag [#allocation7], 1
    %517 = vsyncpa %s516, 1

</llo_original>
